<compile_context>
chip_gen: v6e
topology: v6e:2x2x1
jax: 0.10.0
libtpu: 0.0.40
codegen_flags: <defaults>
</compile_context>

<pallas_src>
import numpy as np
import jax
import jax.numpy as jnp
from jax.experimental import pallas as pl
from jax.experimental.pallas import tpu as pltpu

# Synthetic stand-in for `lig_feature_dims`:
#   (list of categorical vocab sizes, number of scalar features)
LIG_FEATURE_DIMS = ([16, 8, 12, 6, 4, 10, 8, 6, 2], 3)
EMB_DIM = 32              # = ns in the original model config
VOCAB_PAD = 128           # concatenated vocab (72) padded to one full lane width
MAX_TILE_N = 4096         # ~10 MiB VMEM footprint at this tile size


def _round_up(a, b):
    return -(-a // b) * b


def _choose_tile_n(n, max_tile=MAX_TILE_N):
    """Pick a node-tile size.

    Uses the largest tile up to max_tile, but never more than ceil(n/2)
    (rounded to the sublane multiple of 8) so the grid has >=2 steps whenever
    possible and the 'parallel' axis can shard across v7x's two TensorCores.
    """
    half = _round_up(-(-n // 2), 8)
    return max(8, min(max_tile, half))


def atom_encoder_kernel(idx_ref, table_ref, out_ref):
    # idx_ref:   [TILE_N, F] int32 -- indices offset into concatenated vocab.
    # table_ref: [VOCAB_PAD, D]    -- zero-padded concat table (VMEM-resident).
    # out_ref:   [TILE_N, D] f32   -- sum over features of gathered embeddings.
    idx = idx_ref[...]                                           # [TILE_N, F]
    tn, f_cat = idx.shape

    iota_v = jax.lax.broadcasted_iota(jnp.int32, (tn, VOCAB_PAD), 1)

    # Multi-hot count tile, statically unrolled over features, accumulated in
    # int32; a single cast to the matmul dtype happens just before the dot.
    counts = jnp.zeros((tn, VOCAB_PAD), jnp.int32)
    for f in range(f_cat):
        counts = counts + (idx[:, f:f + 1] == iota_v).astype(jnp.int32)

    counts_mm = counts.astype(table_ref.dtype)                   # single cast

    # One MXU matmul (K = 128) does the sum of F embedding gathers.
    out_ref[...] = jnp.dot(counts_mm, table_ref[...],
                           preferred_element_type=jnp.float32)   # [TILE_N, D]


def make_params(key, emb_dim=EMB_DIM):
    """Deterministic xavier_uniform init for each embedding table."""
    cat_dims, _ = LIG_FEATURE_DIMS
    tables = []
    for dim in cat_dims:
        key, sub = jax.random.split(key)
        limit = float(np.sqrt(6.0 / (dim + emb_dim)))
        tables.append(jax.random.uniform(sub, (dim, emb_dim), jnp.float32,
                                         minval=-limit, maxval=limit))
    return tables


def atom_encoder_forward(x, tables, *, use_bf16=False):
    """x: [N, F_cat + F_scalar] integer node features; returns [N, EMB_DIM] f32.

    use_bf16: run the MXU contraction with a bf16 table (counts stay exact).
    ~1e-3 relative error on the output; keep False when bit-level parity with
    the f32 reference matters.
    """
    cat_dims, num_scalar = LIG_FEATURE_DIMS
    f_cat = len(cat_dims)
    assert x.shape[1] == f_cat + num_scalar, "feature count mismatch"

    # Offsets into the concatenated vocabulary (glue, plain JAX).
    offsets = jnp.asarray(
        np.concatenate([[0], np.cumsum(cat_dims)[:-1]]).astype(np.int32))
    idx = x[:, :f_cat].astype(jnp.int32) + offsets[None, :]          # [N, F_cat]

    # Concatenate and zero-pad the table to VOCAB_PAD rows (numerical no-op).
    table = jnp.concatenate(tables, axis=0).astype(jnp.float32)      # [V, D]
    v_total, d = table.shape
    assert v_total <= VOCAB_PAD
    table = jnp.pad(table, ((0, VOCAB_PAD - v_total), (0, 0)))       # [128, D]
    if use_bf16:
        table = table.astype(jnp.bfloat16)

    n = x.shape[0]
    tile_n = _choose_tile_n(n)
    n_pad = _round_up(n, tile_n)
    if n_pad != n:
        # Padded rows index vocab row 0 -> garbage rows, sliced off below.
        idx = jnp.pad(idx, ((0, n_pad - n), (0, 0)))

    out = pl.pallas_call(
        atom_encoder_kernel,
        out_shape=jax.ShapeDtypeStruct((n_pad, d), jnp.float32),
        grid_spec=pl.GridSpec(
            grid=(n_pad // tile_n,),
            in_specs=[
                pl.BlockSpec((tile_n, f_cat), lambda i: (i, 0)),     # tiled idx
                pl.BlockSpec((VOCAB_PAD, d), lambda i: (0, 0)),      # resident table
            ],
            out_specs=pl.BlockSpec((tile_n, d), lambda i: (i, 0)),
        ),
        compiler_params=pltpu.CompilerParams(
            dimension_semantics=("parallel",),
            # ~10 MiB footprint at tile_n=4096; raise above v5e's 16 MiB
            # scoped-VMEM default, still well under every gen's physical VMEM.
            vmem_limit_bytes=32 * 1024 * 1024,
        ),
    )(idx, table)

    return out[:n]


def atom_encoder_reference(x, tables):
    cat_dims, _ = LIG_FEATURE_DIMS
    f_cat = len(cat_dims)
    out = jnp.zeros((x.shape[0], EMB_DIM), jnp.float32)
    for i in range(f_cat):
        out = out + tables[i][x[:, i].astype(jnp.int32)]
    return out


def _make_inputs(key, n_nodes):
    cat_dims, num_scalar = LIG_FEATURE_DIMS
    cols = []
    kk = key
    for dim in cat_dims:
        kk, sub = jax.random.split(kk)
        cols.append(jax.random.randint(sub, (n_nodes, 1), 0, dim, jnp.int32))
    for _ in range(num_scalar):
        kk, sub = jax.random.split(kk)
        cols.append(jax.random.randint(sub, (n_nodes, 1), 0, 5, jnp.int32))
    return jnp.concatenate(cols, axis=1)     # [N, F_cat + F_scalar]


if __name__ == "__main__":
    key = jax.random.PRNGKey(0)
    k_params, k_x = jax.random.split(key)

    tables = make_params(k_params)

    # Small case (exercises tail padding: 23 -> tile 16, two grid steps) and a
    # multi-tile case (600 nodes -> two 304-row tiles).
    for n_nodes in (23, 600):
        k_x, sub = jax.random.split(k_x)
        x = _make_inputs(sub, n_nodes)

        out = atom_encoder_forward(x, tables)
        out = jax.block_until_ready(out)

        ref = atom_encoder_reference(x, tables)
        assert out.shape == (n_nodes, EMB_DIM)
        assert jnp.allclose(out, ref, atol=1e-5, rtol=1e-5), \
            f"mismatch vs reference at n_nodes={n_nodes}"

        # Optional bf16 MXU path: counts are exact, table rounds to ~1e-3.
        out_bf16 = jax.block_until_ready(
            atom_encoder_forward(x, tables, use_bf16=True))
        assert jnp.allclose(out_bf16, ref, atol=2e-2, rtol=2e-2), \
            f"bf16 path out of tolerance at n_nodes={n_nodes}"

    print("KERNEL_OK")
</pallas_src>

<mosaic_0001>
module attributes {stable_mosaic.version = 11 : i64} {
  func.func @atom_encoder_kernel(%arg0: i32, %arg1: memref<16x9xi32, #tpu.memory_space<vmem>>, %arg2: memref<128x32xf32, #tpu.memory_space<vmem>>, %arg3: memref<16x32xf32, #tpu.memory_space<vmem>>) attributes {dimension_semantics = [#tpu.dimension_semantics<parallel>], iteration_bounds = array<i64: 2>, scalar_prefetch = 0 : i64, scratch_operands = 0 : i64, tpu.core_type = #tpu.core_type<tc>, window_params = [{transform_indices = @transform_0, window_bounds = array<i64: 16, 9>}, {pipeline_mode = #tpu.pipeline_mode<synchronous>, transform_indices = @transform_1, window_bounds = array<i64: 128, 32>}, {transform_indices = @transform_2, window_bounds = array<i64: 16, 32>}]} {
    %c0 = arith.constant 0 : index
    %c0_0 = arith.constant 0 : index
    %0 = vector.load %arg1[%c0, %c0_0] : memref<16x9xi32, #tpu.memory_space<vmem>>, vector<16x9xi32>
    %1 = tpu.iota {dimensions = array<i32: 1>} : vector<16x128xi32>
    %c0_i32 = arith.constant 0 : i32
    %2 = vector.broadcast %c0_i32 : i32 to vector<16x128xi32>
    %3 = vector.extract_strided_slice %0 {offsets = [0, 0], sizes = [16, 1], strides = [1, 1]} : vector<16x9xi32> to vector<16x1xi32>
    %4 = vector.broadcast %3 : vector<16x1xi32> to vector<16x128xi32>
    %5 = arith.cmpi eq, %4, %1 : vector<16x128xi32>
    %6 = arith.extui %5 : vector<16x128xi1> to vector<16x128xi32>
    %7 = arith.addi %2, %6 : vector<16x128xi32>
    %8 = vector.extract_strided_slice %0 {offsets = [0, 1], sizes = [16, 1], strides = [1, 1]} : vector<16x9xi32> to vector<16x1xi32>
    %9 = vector.broadcast %8 : vector<16x1xi32> to vector<16x128xi32>
    %10 = arith.cmpi eq, %9, %1 : vector<16x128xi32>
    %11 = arith.extui %10 : vector<16x128xi1> to vector<16x128xi32>
    %12 = arith.addi %7, %11 : vector<16x128xi32>
    %13 = vector.extract_strided_slice %0 {offsets = [0, 2], sizes = [16, 1], strides = [1, 1]} : vector<16x9xi32> to vector<16x1xi32>
    %14 = vector.broadcast %13 : vector<16x1xi32> to vector<16x128xi32>
    %15 = arith.cmpi eq, %14, %1 : vector<16x128xi32>
    %16 = arith.extui %15 : vector<16x128xi1> to vector<16x128xi32>
    %17 = arith.addi %12, %16 : vector<16x128xi32>
    %18 = vector.extract_strided_slice %0 {offsets = [0, 3], sizes = [16, 1], strides = [1, 1]} : vector<16x9xi32> to vector<16x1xi32>
    %19 = vector.broadcast %18 : vector<16x1xi32> to vector<16x128xi32>
    %20 = arith.cmpi eq, %19, %1 : vector<16x128xi32>
    %21 = arith.extui %20 : vector<16x128xi1> to vector<16x128xi32>
    %22 = arith.addi %17, %21 : vector<16x128xi32>
    %23 = vector.extract_strided_slice %0 {offsets = [0, 4], sizes = [16, 1], strides = [1, 1]} : vector<16x9xi32> to vector<16x1xi32>
    %24 = vector.broadcast %23 : vector<16x1xi32> to vector<16x128xi32>
    %25 = arith.cmpi eq, %24, %1 : vector<16x128xi32>
    %26 = arith.extui %25 : vector<16x128xi1> to vector<16x128xi32>
    %27 = arith.addi %22, %26 : vector<16x128xi32>
    %28 = vector.extract_strided_slice %0 {offsets = [0, 5], sizes = [16, 1], strides = [1, 1]} : vector<16x9xi32> to vector<16x1xi32>
    %29 = vector.broadcast %28 : vector<16x1xi32> to vector<16x128xi32>
    %30 = arith.cmpi eq, %29, %1 : vector<16x128xi32>
    %31 = arith.extui %30 : vector<16x128xi1> to vector<16x128xi32>
    %32 = arith.addi %27, %31 : vector<16x128xi32>
    %33 = vector.extract_strided_slice %0 {offsets = [0, 6], sizes = [16, 1], strides = [1, 1]} : vector<16x9xi32> to vector<16x1xi32>
    %34 = vector.broadcast %33 : vector<16x1xi32> to vector<16x128xi32>
    %35 = arith.cmpi eq, %34, %1 : vector<16x128xi32>
    %36 = arith.extui %35 : vector<16x128xi1> to vector<16x128xi32>
    %37 = arith.addi %32, %36 : vector<16x128xi32>
    %38 = vector.extract_strided_slice %0 {offsets = [0, 7], sizes = [16, 1], strides = [1, 1]} : vector<16x9xi32> to vector<16x1xi32>
    %39 = vector.broadcast %38 : vector<16x1xi32> to vector<16x128xi32>
    %40 = arith.cmpi eq, %39, %1 : vector<16x128xi32>
    %41 = arith.extui %40 : vector<16x128xi1> to vector<16x128xi32>
    %42 = arith.addi %37, %41 : vector<16x128xi32>
    %43 = vector.extract_strided_slice %0 {offsets = [0, 8], sizes = [16, 1], strides = [1, 1]} : vector<16x9xi32> to vector<16x1xi32>
    %44 = vector.broadcast %43 : vector<16x1xi32> to vector<16x128xi32>
    %45 = arith.cmpi eq, %44, %1 : vector<16x128xi32>
    %46 = arith.extui %45 : vector<16x128xi1> to vector<16x128xi32>
    %47 = arith.addi %42, %46 : vector<16x128xi32>
    %48 = arith.sitofp %47 : vector<16x128xi32> to vector<16x128xf32>
    %c0_1 = arith.constant 0 : index
    %c0_2 = arith.constant 0 : index
    %49 = vector.load %arg2[%c0_1, %c0_2] : memref<128x32xf32, #tpu.memory_space<vmem>>, vector<128x32xf32>
    %cst = arith.constant dense<0.000000e+00> : vector<16x32xf32>
    %50 = tpu.matmul %48, %49, %cst {dimension_numbers = #tpu.dot_dimension_numbers<[1], [0], [0], [1], [0, 0, 1, 1], [], []>} : vector<16x128xf32>, vector<128x32xf32>, vector<16x32xf32> -> vector<16x32xf32>
    %c0_3 = arith.constant 0 : index
    %c0_4 = arith.constant 0 : index
    %51 = vector.load %arg3[%c0_3, %c0_4] : memref<16x32xf32, #tpu.memory_space<vmem>>, vector<16x32xf32>
    tpu.vector_store %arg3[%c0_3, %c0_4], %50 {strides = array<i32>} : memref<16x32xf32, #tpu.memory_space<vmem>>, vector<16x32xf32>,
    return
  }
  func.func @transform_0(%arg0: i32) -> (i32, i32) {
    %c0_i32 = arith.constant 0 : i32
    %c0_i32_0 = arith.constant 0 : i32
    return %arg0, %c0_i32 : i32, i32
  }
  func.func @transform_1(%arg0: i32) -> (i32, i32) {
    %c0_i32 = arith.constant 0 : i32
    %c0_i32_0 = arith.constant 0 : i32
    %c0_i32_1 = arith.constant 0 : i32
    return %c0_i32, %c0_i32_0 : i32, i32
  }
  func.func @transform_2(%arg0: i32) -> (i32, i32) {
    %c0_i32 = arith.constant 0 : i32
    %c0_i32_0 = arith.constant 0 : i32
    return %arg0, %c0_i32 : i32, i32
  }
}

</mosaic_0001>

<llo_original>
// kernel: tpu_custom_call.1
$region0: #{tpu_custom_call.1}
  #allocation0 [shape = 'u32[]', space=smem, size = 0x4, offset = 0x4, fixed_abs, tag = 'smem constant byte address 0x4 - core index']
  #allocation1 [shape = 'u32[144,128]{1,0:T(1,128)}', space=vmem, size = 0x12000, scoped, tag = 'internal scratch']
  %s0 = inlined_call_operand.vmem [shape: s32[32,9], index: 0, kind: input, shape index: {}]
  %s1 = inlined_call_operand.vmem [shape: f32[128,32], index: 1, kind: input, shape index: {}]
  %s2 = inlined_call_operand.hbm [shape: f32[32,32], index: 2, kind: output, shape index: {}]
  %s3 = sld [smem:[#allocation0]]
  $region41: #{tpu_custom_call.1} parent=0
    _
  %s5 = ssub.s32 1, %s3
  %s6 = scalar_select 0, %s5, %s3
  $region1: #{tpu_custom_call.1} parent=0
    #allocation2 [shape = 'u8[16384]{0}', space=vmem, size = 0x4000, scoped, tag = 'output window, operand 0']
    #allocation3 [shape = 's32[2]{0}', space=sflag, size = 0x8, scoped, tag = 'scoped memory for tpu_custom_call.1']
    %7 = vsyncpa [#allocation3], 0
    %s8 = scalar_lea.sflag [#allocation3], 1
    %9 = vsyncpa %s8, 0
    loop: start=0, step=1, limit=4
    $region2: #{tpu_custom_call.1} parent=1 // loop_pre_header
      _
    $region3: #{tpu_custom_call.1} parent=1 // loop_header
      %s11 = sphi 0, %s15
      %p12 = scmp.ge.s32.totalorder %s11, 4
      %s21 = sphi 0, %s23
      %s24 = sphi 0, %s21
      %s25 = sphi 0, %s24
      %s41 = sphi 0, %s25
      %s45 = sphi 0, %s45
      %s47 = sphi 0, %s45
      %s48 = sphi 0, %s47
      %s62 = sphi 0, %s48
      %s68 = sphi 0, %s70
      %s71 = sphi 0, %s68
      %s72 = sphi 0, %s71
      %s88 = sphi 0, %s72
    $region4: #{tpu_custom_call.1} parent=1 // loop_header_branch
      %14 = sbr.rel (%p12) target = $region8
    $region5: #{tpu_custom_call.1} parent=1 // loop_body
      %s16 = ssub.s32 %s11, 1
      %s17 = ssub.s32 %s11, 2
      %s18 = sadd.s32 %s11, 1
      %s19 = ssub.s32 %s11, %s18
      %p20 = scmp.eq.s32.totalorder %s19, 0
      %s22 = sadd.s32 %s21, 1
      %s23 = scalar_select %p20, %s21, %s22
      %p26 = pneg %p20
      %p27 = scmp.eq.s32.totalorder %s11, 1
      %p28 = por %p26, %p27
      %p29 = scmp.ne.s32.totalorder %s21, %s24
      %p30 = scmp.eq.s32.totalorder %s11, 0
      %p31 = por %p29, %p30
      %p32 = scmp.ne.s32.totalorder %s21, %s24
      %p33 = scmp.eq.s32.totalorder %s16, 1
      %p34 = por %p32, %p33
      %p35 = scmp.ne.s32.totalorder %s24, %s25
      %p36 = scmp.eq.s32.totalorder %s16, 0
      %p37 = por %p35, %p36
      %p38 = scmp.ne.s32.totalorder %s24, %s25
      %p39 = scmp.eq.s32.totalorder %s17, 1
      %p40 = por %p38, %p39
      %p42 = scmp.ne.s32.totalorder %s25, %s41
      %p43 = scmp.eq.s32.totalorder %s17, 0
      %p44 = por %p42, %p43
      %s46 = sadd.s32 %s45, 1
      %p49 = scmp.eq.s32.totalorder %s11, 1
      %p50 = scmp.ne.s32.totalorder %s45, %s47
      %p51 = scmp.eq.s32.totalorder %s11, 0
      %p52 = por %p50, %p51
      %p53 = scmp.ne.s32.totalorder %s45, %s47
      %p54 = scmp.eq.s32.totalorder %s16, 1
      %p55 = por %p53, %p54
      %p56 = scmp.ne.s32.totalorder %s47, %s48
      %p57 = scmp.eq.s32.totalorder %s16, 0
      %p58 = por %p56, %p57
      %p59 = scmp.ne.s32.totalorder %s47, %s48
      %p60 = scmp.eq.s32.totalorder %s17, 1
      %p61 = por %p59, %p60
      %p63 = scmp.ne.s32.totalorder %s48, %s62
      %p64 = scmp.eq.s32.totalorder %s17, 0
      %p65 = por %p63, %p64
      %s66 = ssub.s32 %s11, %s18
      %p67 = scmp.eq.s32.totalorder %s66, 0
      %s69 = sadd.s32 %s68, 1
      %s70 = scalar_select %p67, %s68, %s69
      %p73 = pneg %p67
      %p74 = scmp.eq.s32.totalorder %s11, 1
      %p75 = por %p73, %p74
      %p76 = scmp.ne.s32.totalorder %s68, %s71
      %p77 = scmp.eq.s32.totalorder %s11, 0
      %p78 = por %p76, %p77
      %p79 = scmp.ne.s32.totalorder %s68, %s71
      %p80 = scmp.eq.s32.totalorder %s16, 1
      %p81 = por %p79, %p80
      %p82 = scmp.ne.s32.totalorder %s71, %s72
      %p83 = scmp.eq.s32.totalorder %s16, 0
      %p84 = por %p82, %p83
      %p85 = scmp.ne.s32.totalorder %s71, %s72
      %p86 = scmp.eq.s32.totalorder %s17, 1
      %p87 = por %p85, %p86
      %p89 = scmp.ne.s32.totalorder %s72, %s88
      %p90 = scmp.eq.s32.totalorder %s17, 0
      %p91 = por %p89, %p90
      %p92 = scmp.le.s32.totalorder 1, %s11
      %p93 = scmp.lt.s32.totalorder %s11, 3
      %p94 = pnand %p92, %p93
      %p95 = pneg %p94
      // Predicated region
      $region9: #{tpu_custom_call.1} parent=5 // pred_check
        _
      $region10: #{tpu_custom_call.1} parent=5 // pred_check_branch
        %97 = sbr.rel (%p94) target = $region12
      $region11: #{tpu_custom_call.1} parent=5 // pred_region
        %s98 = ssub.s32 %s11, 1
        // Predicated region
        $region13: #{tpu_custom_call.1} parent=11 // pred_check
          %p99 = pneg %p58
        $region14: #{tpu_custom_call.1} parent=11 // pred_check_branch
          %101 = sbr.rel (%p99) target = $region16
        $region15: #{tpu_custom_call.1} parent=11 // pred_region
          _
        $region16: #{tpu_custom_call.1} parent=11 // pred_fallthru
          _
      $region12: #{tpu_custom_call.1} parent=5 // pred_fallthru
        _
      %p102 = scmp.lt.s32.totalorder %s11, 2
      // Predicated region
      $region17: #{tpu_custom_call.1} parent=5 // pred_check
        %p103 = pneg %p102
      $region18: #{tpu_custom_call.1} parent=5 // pred_check_branch
        %105 = sbr.rel (%p103) target = $region20
      $region19: #{tpu_custom_call.1} parent=5 // pred_region
        // Predicated region
        $region21: #{tpu_custom_call.1} parent=19 // pred_check
          %p106 = pneg %p31
        $region22: #{tpu_custom_call.1} parent=19 // pred_check_branch
          %108 = sbr.rel (%p106) target = $region24
        $region23: #{tpu_custom_call.1} parent=19 // pred_region
          %s109 = smul.u32 2, %s11
          %p110 = scmp.lt.s32.totalorder %s109, 3
          %s111 = scalar_select %p110, %s109, 3
          %s112 = smul.addr %s111, 8
          %s113 = scalar_lea.vmem %s0, %s112
          %s114 = smul.u32 2, %s11
        $region24: #{tpu_custom_call.1} parent=19 // pred_fallthru
          _
      $region20: #{tpu_custom_call.1} parent=5 // pred_fallthru
        _
      %p115 = scmp.le.s32.totalorder 1, %s11
      %p116 = scmp.lt.s32.totalorder %s11, 3
      %p117 = pnand %p115, %p116
      %p118 = pneg %p117
      // Predicated region
      $region25: #{tpu_custom_call.1} parent=5 // pred_check
        _
      $region26: #{tpu_custom_call.1} parent=5 // pred_check_branch
        %120 = sbr.rel (%p117) target = $region28
      $region27: #{tpu_custom_call.1} parent=5 // pred_region
        %s121 = ssub.s32 %s11, 1
        %s122 = smul.u32 2, %s16
        %p123 = scmp.lt.s32.totalorder %s122, 3
        %s124 = scalar_select %p123, %s122, 3
        %s125 = smul.addr %s124, 8
        %s126 = scalar_lea.vmem %s0, %s125
        %p127 = pneg %p37
        %p128 = pneg %p34
        %p129 = pneg %p58
        %p130 = pneg %p55
        %p131 = pneg %p84
        %p132 = pneg %p81
        %s133 = sand.u32 %s71, 1
        %s134 = scalar_lea.sflag [#allocation3], %s133
        %s135 = sand.u32 %s71, 1
        %s136 = smul.addr %s135, 16
        %s137 = scalar_lea.vmem [#allocation2], %s136
        %s138 = smul.u32 2, %s16
        %p139 = scmp.lt.s32.totalorder %s138, 3
        %s140 = scalar_select %p139, %s138, 3
        %s141 = smul.addr %s140, 8
        %s142 = scalar_lea.vmem %s0, %s141
        %s143 = smul.u32 2, %s16
        %s144 = smul.u32 2, %s16
        %v145 = vld [vmem:[%s142] sm:$0xff]
        %v146 = vld [vmem:[%s142 + $0x8] sm:$0xff]
        %v147 = vlaneseq
        %v148 = vand.u32 %v147, 127
        %149 = vset.pattern.permute.xlu0 0
        %150 = vperm.xlu0 %149, %v145
        %v151 = vpop.permute.xlu0 %150
        %152 = vset.pattern.permute.xlu0 0
        %153 = vperm.xlu0 %152, %v146
        %v154 = vpop.permute.xlu0 %153
        %vm155 = vcmp.eq.s32.totalorder %v151, %v148
        %vm156 = vcmp.eq.s32.totalorder %v154, %v148
        %v157 = vsel %vm155, 1, 0
        %v158 = vsel %vm156, 1, 0
        %159 = vset.pattern.permute.xlu0 1
        %160 = vperm.xlu0 %159, %v145
        %v161 = vpop.permute.xlu0 %160
        %162 = vset.pattern.permute.xlu0 1
        %163 = vperm.xlu0 %162, %v146
        %v164 = vpop.permute.xlu0 %163
        %vm165 = vcmp.eq.s32.totalorder %v161, %v148
        %vm166 = vcmp.eq.s32.totalorder %v164, %v148
        %v167 = vsel %vm165, 1, 0
        %v168 = vsel %vm166, 1, 0
        %v169 = vadd.s32 %v157, %v167
        %v170 = vadd.s32 %v158, %v168
        %171 = vset.pattern.permute.xlu0 2
        %172 = vperm.xlu0 %171, %v145
        %v173 = vpop.permute.xlu0 %172
        %174 = vset.pattern.permute.xlu0 2
        %175 = vperm.xlu0 %174, %v146
        %v176 = vpop.permute.xlu0 %175
        %vm177 = vcmp.eq.s32.totalorder %v173, %v148
        %vm178 = vcmp.eq.s32.totalorder %v176, %v148
        %v179 = vsel %vm177, 1, 0
        %v180 = vsel %vm178, 1, 0
        %v181 = vadd.s32 %v169, %v179
        %v182 = vadd.s32 %v170, %v180
        %183 = vset.pattern.permute.xlu0 3
        %184 = vperm.xlu0 %183, %v145
        %v185 = vpop.permute.xlu0 %184
        %186 = vset.pattern.permute.xlu0 3
        %187 = vperm.xlu0 %186, %v146
        %v188 = vpop.permute.xlu0 %187
        %vm189 = vcmp.eq.s32.totalorder %v185, %v148
        %vm190 = vcmp.eq.s32.totalorder %v188, %v148
        %v191 = vsel %vm189, 1, 0
        %v192 = vsel %vm190, 1, 0
        %v193 = vadd.s32 %v181, %v191
        %v194 = vadd.s32 %v182, %v192
        %195 = vset.pattern.permute.xlu0 4
        %196 = vperm.xlu0 %195, %v145
        %v197 = vpop.permute.xlu0 %196
        %198 = vset.pattern.permute.xlu0 4
        %199 = vperm.xlu0 %198, %v146
        %v200 = vpop.permute.xlu0 %199
        %vm201 = vcmp.eq.s32.totalorder %v197, %v148
        %vm202 = vcmp.eq.s32.totalorder %v200, %v148
        %v203 = vsel %vm201, 1, 0
        %v204 = vsel %vm202, 1, 0
        %v205 = vadd.s32 %v193, %v203
        %v206 = vadd.s32 %v194, %v204
        %207 = vset.pattern.permute.xlu0 5
        %208 = vperm.xlu0 %207, %v145
        %v209 = vpop.permute.xlu0 %208
        %210 = vset.pattern.permute.xlu0 5
        %211 = vperm.xlu0 %210, %v146
        %v212 = vpop.permute.xlu0 %211
        %vm213 = vcmp.eq.s32.totalorder %v209, %v148
        %vm214 = vcmp.eq.s32.totalorder %v212, %v148
        %v215 = vsel %vm213, 1, 0
        %v216 = vsel %vm214, 1, 0
        %v217 = vadd.s32 %v205, %v215
        %v218 = vadd.s32 %v206, %v216
        %219 = vset.pattern.permute.xlu0 6
        %220 = vperm.xlu0 %219, %v145
        %v221 = vpop.permute.xlu0 %220
        %222 = vset.pattern.permute.xlu0 6
        %223 = vperm.xlu0 %222, %v146
        %v224 = vpop.permute.xlu0 %223
        %vm225 = vcmp.eq.s32.totalorder %v221, %v148
        %vm226 = vcmp.eq.s32.totalorder %v224, %v148
        %v227 = vsel %vm225, 1, 0
        %v228 = vsel %vm226, 1, 0
        %v229 = vadd.s32 %v217, %v227
        %v230 = vadd.s32 %v218, %v228
        %231 = vset.pattern.permute.xlu0 7
        %232 = vperm.xlu0 %231, %v145
        %v233 = vpop.permute.xlu0 %232
        %234 = vset.pattern.permute.xlu0 7
        %235 = vperm.xlu0 %234, %v146
        %v236 = vpop.permute.xlu0 %235
        %vm237 = vcmp.eq.s32.totalorder %v233, %v148
        %vm238 = vcmp.eq.s32.totalorder %v236, %v148
        %v239 = vsel %vm237, 1, 0
        %v240 = vsel %vm238, 1, 0
        %v241 = vadd.s32 %v229, %v239
        %v242 = vadd.s32 %v230, %v240
        %243 = vset.pattern.permute.xlu0 8
        %244 = vperm.xlu0 %243, %v145
        %v245 = vpop.permute.xlu0 %244
        %246 = vset.pattern.permute.xlu0 8
        %247 = vperm.xlu0 %246, %v146
        %v248 = vpop.permute.xlu0 %247
        %vm249 = vcmp.eq.s32.totalorder %v245, %v148
        %vm250 = vcmp.eq.s32.totalorder %v248, %v148
        %v251 = vsel %vm249, 1, 0
        %v252 = vsel %vm250, 1, 0
        %v253 = vadd.s32 %v241, %v251
        %v254 = vadd.s32 %v242, %v252
        %v255 = vcvt.s32.f32 %v253
        %v256 = vcvt.s32.f32 %v254
        %v257 = vld [vmem:[%s1] sm:$0xff]
        %v258 = vld [vmem:[%s1 + $0x8] sm:$0xff]
        %v259 = vld [vmem:[%s1 + $0x10] sm:$0xff]
        %v260 = vld [vmem:[%s1 + $0x18] sm:$0xff]
        %v261 = vld [vmem:[%s1 + $0x20] sm:$0xff]
        %v262 = vld [vmem:[%s1 + $0x28] sm:$0xff]
        %v263 = vld [vmem:[%s1 + $0x30] sm:$0xff]
        %v264 = vld [vmem:[%s1 + $0x38] sm:$0xff]
        %v265 = vld [vmem:[%s1 + $0x40] sm:$0xff]
        %v266 = vld [vmem:[%s1 + $0x48] sm:$0xff]
        %v267 = vld [vmem:[%s1 + $0x50] sm:$0xff]
        %v268 = vld [vmem:[%s1 + $0x58] sm:$0xff]
        %v269 = vld [vmem:[%s1 + $0x60] sm:$0xff]
        %v270 = vld [vmem:[%s1 + $0x68] sm:$0xff]
        %v271 = vld [vmem:[%s1 + $0x70] sm:$0xff]
        %v272 = vld [vmem:[%s1 + $0x78] sm:$0xff]
        %273 = vmatprep.subr.mxu0 0.0
        %274 = vmatpush1.msra.mxu0 %v272
        %275 = vmatprep.subr.mxu0 0.0
        %276 = vmatpush1.msra.mxu0 %v271
        %277 = vmatprep.subr.mxu0 0.0
        %278 = vmatpush1.msra.mxu0 %v270
        %279 = vmatprep.subr.mxu0 0.0
        %280 = vmatpush1.msra.mxu0 %v269
        %281 = vmatprep.subr.mxu0 0.0
        %282 = vmatpush1.msra.mxu0 %v268
        %283 = vmatprep.subr.mxu0 0.0
        %284 = vmatpush1.msra.mxu0 %v267
        %285 = vmatprep.subr.mxu0 0.0
        %286 = vmatpush1.msra.mxu0 %v266
        %287 = vmatprep.subr.mxu0 0.0
        %288 = vmatpush1.msra.mxu0 %v265
        %289 = vmatprep.subr.mxu0 0.0
        %290 = vmatpush1.msra.mxu0 %v264
        %291 = vmatprep.subr.mxu0 0.0
        %292 = vmatpush1.msra.mxu0 %v263
        %293 = vmatprep.subr.mxu0 0.0
        %294 = vmatpush1.msra.mxu0 %v262
        %295 = vmatprep.subr.mxu0 0.0
        %296 = vmatpush1.msra.mxu0 %v261
        %297 = vmatprep.subr.mxu0 0.0
        %298 = vmatpush1.msra.mxu0 %v260
        %299 = vmatprep.subr.mxu0 0.0
        %300 = vmatpush1.msra.mxu0 %v259
        %301 = vmatprep.subr.mxu0 0.0
        %302 = vmatpush1.msra.mxu0 %v258
        %303 = vmatprep.subr.mxu0 0.0
        %304 = vmatpush1.msra.mxu0 %v257
        %305 = vmatprep.subr.mxu0 0.0
        %306 = vmatpush2.msra.mxu0 0.0
        %307 = vmatprep.subr.mxu0 0.0
        %308 = vmatpush2.msra.mxu0 0.0
        %309 = vmatprep.subr.mxu0 0.0
        %310 = vmatpush2.msra.mxu0 0.0
        %311 = vmatprep.subr.mxu0 0.0
        %312 = vmatpush2.msra.mxu0 0.0
        %313 = vmatprep.subr.mxu0 0.0
        %314 = vmatpush2.msra.mxu0 0.0
        %315 = vmatprep.subr.mxu0 0.0
        %316 = vmatpush2.msra.mxu0 0.0
        %317 = vmatprep.subr.mxu0 0.0
        %318 = vmatpush2.msra.mxu0 0.0
        %319 = vmatprep.subr.mxu0 0.0
        %320 = vmatpush2.msra.mxu0 0.0
        %321 = vmatprep.subr.mxu0 0.0
        %322 = vmatpush2.msra.mxu0 0.0
        %323 = vmatprep.subr.mxu0 0.0
        %324 = vmatpush2.msra.mxu0 0.0
        %325 = vmatprep.subr.mxu0 0.0
        %326 = vmatpush2.msra.mxu0 0.0
        %327 = vmatprep.subr.mxu0 0.0
        %328 = vmatpush2.msra.mxu0 0.0
        %329 = vmatprep.subr.mxu0 0.0
        %330 = vmatpush2.msra.mxu0 0.0
        %331 = vmatprep.subr.mxu0 0.0
        %332 = vmatpush2.msra.mxu0 0.0
        %333 = vmatprep.subr.mxu0 0.0
        %334 = vmatpush2.msra.mxu0 0.0
        %335 = vmatprep.subr.mxu0 0.0
        %336 = vmatpush2.msra.mxu0 0.0
        %337 = vmatprep.mubr.f32.mxu0 0.0
        %338 = vmatmul.mubr.f32.gmra.mxu0 %v255
        %v339 = vpop.f32.mrf.mxu0
        %v340 = vadd.f32 0.0, %v339
        %v341 = vpop.f32.mrf.mxu0
        %342 = vmatprep.mubr.f32.mxu0 0.0
        %343 = vmatmul.mubr.f32.gmra.mxu0 %v256
        %v344 = vpop.f32.mrf.mxu0
        %v345 = vadd.f32 0.0, %v344
        %v346 = vpop.f32.mrf.mxu0
        %347 = vdwg.mxu0
        %vm348 = vcmask 261120
        %349 = vst.msk [vmem:[%s137] sm:$0xff] %vm348, %v340
        %350 = vst.msk [vmem:[%s137 + $0x8] sm:$0xff] %vm348, %v345
        %s351 = sand.u32 %s71, 1
        %s352 = scalar_lea.sflag [#allocation3], %s351
        %s353 = sand.u32 %s71, 1
        %s354 = smul.addr %s353, 16
        %s355 = scalar_lea.vmem [#allocation2], %s354
        // Predicated region
        $region29: #{tpu_custom_call.1} parent=27 // pred_check
          %p356 = pneg %p81
        $region30: #{tpu_custom_call.1} parent=27 // pred_check_branch
          %358 = sbr.rel (%p356) target = $region32
        $region31: #{tpu_custom_call.1} parent=27 // pred_region
          %s359 = smul.u32 2, %s16
          %s361 = ssub.s32 256, 256
          %362 = vsyncadd %s352, %s361
          %s363 = smul.addr %s359, 128
          %s364 = scalar_lea.hbm %s2, %s363
          %s365 = sshll.u32 %s355, 4
          %s366 = int_to_ptr.vmem [resolvable:$true] %s365
          %371 = dma.vmem_to_hbm [thread:$0]  %s366, 256, %s364, %s352, 128, 128, 8
        $region32: #{tpu_custom_call.1} parent=27 // pred_fallthru
          _
      $region28: #{tpu_custom_call.1} parent=5 // pred_fallthru
        _
      %p372 = scmp.le.s32.totalorder 2, %s11
      // Predicated region
      $region33: #{tpu_custom_call.1} parent=5 // pred_check
        %p373 = pneg %p372
      $region34: #{tpu_custom_call.1} parent=5 // pred_check_branch
        %375 = sbr.rel (%p373) target = $region36
      $region35: #{tpu_custom_call.1} parent=5 // pred_region
        %s376 = ssub.s32 %s11, 2
        // Predicated region
        $region37: #{tpu_custom_call.1} parent=35 // pred_check
          %p377 = pneg %p87
        $region38: #{tpu_custom_call.1} parent=35 // pred_check_branch
          %379 = sbr.rel (%p377) target = $region40
        $region39: #{tpu_custom_call.1} parent=35 // pred_region
          %s380 = sand.u32 %s72, 1
          %s381 = scalar_lea.sflag [#allocation3], %s380
          %s382 = sand.u32 %s72, 1
          %s383 = smul.addr %s382, 16
          %s384 = scalar_lea.vmem [#allocation2], %s383
          %385 = dma.done %s381, 256
        $region40: #{tpu_custom_call.1} parent=35 // pred_fallthru
          _
      $region36: #{tpu_custom_call.1} parent=5 // pred_fallthru
        _
    $region6: #{tpu_custom_call.1} parent=1 // loop_footer
      %s15 = sadd.s32 1, %s11
    $region7: #{tpu_custom_call.1} parent=1 // loop_footer_branch
      %10 = sbr.rel target = $region3
    $region8: #{tpu_custom_call.1} parent=1 // loop_exit
      _
    %386 = vsyncpa [#allocation3], 1
    %s387 = scalar_lea.sflag [#allocation3], 1
    %388 = vsyncpa %s387, 1

</llo_original>
